<compile_context>
chip_gen: v7x
topology: tpu7x:2x2x1
jax: 0.10.0
libtpu: 0.0.40
codegen_flags: <defaults>
</compile_context>

<pallas_src>
import jax
import jax.numpy as jnp
from jax.experimental import pallas as pl
from jax.experimental.pallas import tpu as pltpu

_VMEM_BUDGET = 24 * 1024 * 1024  # conservative working-set target (fits every TPU gen)


def _round_up(x: int, m: int) -> int:
    return ((x + m - 1) // m) * m


def _choose_tb(batch: int, tb_max: int) -> int:
    """Batch tile: multiple of 8 (or == batch), >=2 balanced tiles for big batches."""
    tb_max = max(8, (tb_max // 8) * 8)          # harden: force tb_max to a multiple of 8
    if batch <= 64 and batch <= tb_max:
        return batch                            # one block equal to the full batch dim
    # At least 2 tiles so the "parallel" batch axis can shard across v7x's two
    # TensorCores, balanced so the ragged last tile is not nearly empty.
    n_tiles = max(2, pl.cdiv(batch, tb_max))
    return max(8, _round_up(pl.cdiv(batch, n_tiles), 8))


def _encoder_kernel(x_ref, w_ref, b_ref, o_ref):
    # x_ref: (TB, Fin)   w_ref: (Fin, TN)   b_ref: (1, TN)   o_ref: (TB, TN)
    y = jnp.dot(x_ref[...], w_ref[...], preferred_element_type=jnp.float32)
    y = y + b_ref[...]                     # bias-add & ReLU in f32 (v5e-safe epilogue)
    o_ref[...] = jnp.maximum(y, 0.0).astype(o_ref.dtype)


def static_features_encoder(x, weight, bias, *, tb_max=2048, mxu_dtype=None):
    """Eval-mode StaticFeaturesEncoder forward: relu(x @ weight.T + bias).

    x:      [B, Fin]
    weight: [Fout, Fin]  (PyTorch nn.Linear layout)
    bias:   [Fout]
    mxu_dtype: optional dtype for the MXU operands (e.g. jnp.bfloat16 on v6e/v7x);
               accumulation, epilogue and the output stay float32.
    returns [B, Fout]
    """
    B, Fin = x.shape
    Fout, Fin_w = weight.shape
    assert Fin_w == Fin and bias.shape == (Fout,)
    out_dtype = x.dtype

    if mxu_dtype is not None:
        x = x.astype(mxu_dtype)
        weight = weight.astype(mxu_dtype)

    # One-time transpose of a small static parameter -> canonical (M,K)x(K,N) MXU form.
    w_t = weight.T                               # (Fin, Fout)
    b2 = bias.astype(jnp.float32).reshape(1, Fout)

    xsize = jnp.dtype(x.dtype).itemsize
    wsize = jnp.dtype(w_t.dtype).itemsize
    osize = jnp.dtype(out_dtype).itemsize

    # Fout tile: keep the (double-buffered) weight slab within half the VMEM budget.
    # TN must be == Fout or a multiple of 128 (lane tiling rule).
    if 2 * Fin * Fout * wsize <= _VMEM_BUDGET // 2:
        tn = Fout
    else:
        tn = max(128, ((_VMEM_BUDGET // 2) // (2 * Fin * wsize)) // 128 * 128)
    nj = pl.cdiv(Fout, tn)

    # Batch tile: cap so double-buffered x + out tiles fit the other half of the budget.
    per_row = 2 * (Fin * xsize + tn * osize)
    tb_cap = max(8, ((_VMEM_BUDGET // 2) // per_row) // 8 * 8)
    tb = _choose_tb(B, min(tb_max, tb_cap))
    nb = pl.cdiv(B, tb)

    return pl.pallas_call(
        _encoder_kernel,
        out_shape=jax.ShapeDtypeStruct((B, Fout), out_dtype),
        grid_spec=pl.GridSpec(
            grid=(nb, nj),                                      # j innermost
            in_specs=[
                pl.BlockSpec((tb, Fin), lambda i, j: (i, 0)),   # x: tiled over batch
                pl.BlockSpec((Fin, tn), lambda i, j: (0, j)),   # weight^T: resident per j
                pl.BlockSpec((1, tn), lambda i, j: (0, j)),     # bias
            ],
            out_specs=pl.BlockSpec((tb, tn), lambda i, j: (i, j)),
        ),
        compiler_params=pltpu.CompilerParams(
            dimension_semantics=("parallel", "parallel"),       # all tiles independent
            vmem_limit_bytes=32 * 1024 * 1024,                  # >= budget, <= every gen's VMEM
        ),
    )(x, w_t, b2)


if __name__ == "__main__":
    # Small shapes consistent with the module: a static-features vector per batch item.
    batch, in_features, out_features = 8, 16, 32

    key = jax.random.PRNGKey(0)
    kx, kw, kb = jax.random.split(key, 3)

    # Parameter init mimicking nn.Linear default: U(-1/sqrt(Fin), 1/sqrt(Fin)).
    bound = 1.0 / jnp.sqrt(jnp.float32(in_features))
    weight = jax.random.uniform(kw, (out_features, in_features), jnp.float32, -bound, bound)
    bias = jax.random.uniform(kb, (out_features,), jnp.float32, -bound, bound)
    x = jax.random.normal(kx, (batch, in_features), jnp.float32)

    ref = jnp.maximum(x @ weight.T + bias, 0.0)   # eval-mode dropout = identity

    # f32 path (exact semantics).
    out = jax.block_until_ready(static_features_encoder(x, weight, bias))
    assert out.shape == (batch, out_features)
    assert jnp.allclose(out, ref, atol=1e-5, rtol=1e-5)

    # bf16 MXU-operand path (v6e/v7x bandwidth optimization) -- f32 accumulation/epilogue.
    out_bf16 = jax.block_until_ready(
        static_features_encoder(x, weight, bias, mxu_dtype=jnp.bfloat16))
    assert out_bf16.shape == (batch, out_features)
    assert jnp.allclose(out_bf16, ref, atol=5e-2, rtol=5e-2)

    print("KERNEL_OK")
</pallas_src>

<mosaic_0001>
module attributes {stable_mosaic.version = 11 : i64} {
  func.func @_encoder_kernel(%arg0: i32, %arg1: i32, %arg2: memref<8x16xf32, #tpu.memory_space<vmem>>, %arg3: memref<16x32xf32, #tpu.memory_space<vmem>>, %arg4: memref<1x32xf32, #tpu.memory_space<vmem>>, %arg5: memref<8x32xf32, #tpu.memory_space<vmem>>) attributes {dimension_semantics = [#tpu.dimension_semantics<parallel>, #tpu.dimension_semantics<parallel>], iteration_bounds = array<i64: 1, 1>, scalar_prefetch = 0 : i64, scratch_operands = 0 : i64, tpu.core_type = #tpu.core_type<tc>, window_params = [{transform_indices = @transform_0, window_bounds = array<i64: 8, 16>}, {transform_indices = @transform_1, window_bounds = array<i64: 16, 32>}, {transform_indices = @transform_2, window_bounds = array<i64: 1, 32>}, {transform_indices = @transform_3, window_bounds = array<i64: 8, 32>}]} {
    %c0 = arith.constant 0 : index
    %c0_0 = arith.constant 0 : index
    %0 = vector.load %arg2[%c0, %c0_0] : memref<8x16xf32, #tpu.memory_space<vmem>>, vector<8x16xf32>
    %c0_1 = arith.constant 0 : index
    %c0_2 = arith.constant 0 : index
    %1 = vector.load %arg3[%c0_1, %c0_2] : memref<16x32xf32, #tpu.memory_space<vmem>>, vector<16x32xf32>
    %cst = arith.constant dense<0.000000e+00> : vector<8x32xf32>
    %2 = tpu.matmul %0, %1, %cst {dimension_numbers = #tpu.dot_dimension_numbers<[1], [0], [0], [1], [0, 0, 1, 1], [], []>} : vector<8x16xf32>, vector<16x32xf32>, vector<8x32xf32> -> vector<8x32xf32>
    %c0_3 = arith.constant 0 : index
    %c0_4 = arith.constant 0 : index
    %3 = vector.load %arg4[%c0_3, %c0_4] : memref<1x32xf32, #tpu.memory_space<vmem>>, vector<1x32xf32>
    %4 = vector.broadcast %3 : vector<1x32xf32> to vector<8x32xf32>
    %5 = arith.addf %2, %4 : vector<8x32xf32>
    %cst_5 = arith.constant 0.000000e+00 : f32
    %6 = vector.broadcast %cst_5 : f32 to vector<8x32xf32>
    %7 = arith.maximumf %5, %6 : vector<8x32xf32>
    %c0_6 = arith.constant 0 : index
    %c0_7 = arith.constant 0 : index
    %8 = vector.load %arg5[%c0_6, %c0_7] : memref<8x32xf32, #tpu.memory_space<vmem>>, vector<8x32xf32>
    tpu.vector_store %arg5[%c0_6, %c0_7], %7 {strides = array<i32>} : memref<8x32xf32, #tpu.memory_space<vmem>>, vector<8x32xf32>,
    return
  }
  func.func @transform_0(%arg0: i32, %arg1: i32) -> (i32, i32) {
    %c0_i32 = arith.constant 0 : i32
    %c0_i32_0 = arith.constant 0 : i32
    return %arg0, %c0_i32 : i32, i32
  }
  func.func @transform_1(%arg0: i32, %arg1: i32) -> (i32, i32) {
    %c0_i32 = arith.constant 0 : i32
    %c0_i32_0 = arith.constant 0 : i32
    return %c0_i32, %arg1 : i32, i32
  }
  func.func @transform_2(%arg0: i32, %arg1: i32) -> (i32, i32) {
    %c0_i32 = arith.constant 0 : i32
    %c0_i32_0 = arith.constant 0 : i32
    return %c0_i32, %arg1 : i32, i32
  }
  func.func @transform_3(%arg0: i32, %arg1: i32) -> (i32, i32) {
    %c0_i32 = arith.constant 0 : i32
    return %arg0, %arg1 : i32, i32
  }
}

</mosaic_0001>

<llo_original>
// kernel: tpu_custom_call.1
$region0: #{tpu_custom_call.1}
  #allocation0 [shape = 'u32[]', space=smem, size = 0x4, offset = 0x4, fixed_abs, tag = 'smem constant byte address 0x4 - core index']
  #allocation1 [shape = 'u32[144,128]{1,0:T(1,128)}', space=vmem, size = 0x12000, scoped, tag = 'internal scratch']
  %s0 = inlined_call_operand.hbm [shape: f32[8,16], index: 0, kind: input, shape index: {}]
  %s1 = inlined_call_operand.hbm [shape: f32[16,32], index: 1, kind: input, shape index: {}]
  %s2 = inlined_call_operand.vmem [shape: f32[1,32], index: 2, kind: input, shape index: {}]
  %s3 = inlined_call_operand.hbm [shape: f32[8,32], index: 3, kind: output, shape index: {}]
  %s4 = sld [smem:[#allocation0]]
  $region30: #{tpu_custom_call.1} parent=0
    _
  %s6 = ssub.s32 1, %s4
  %s7 = scalar_select 0, %s6, %s4
  $region1: #{tpu_custom_call.1} parent=0
    #allocation2 [shape = 'u8[4096]{0}', space=vmem, size = 0x1000, scoped, tag = 'input window, operand 0, single buffered']
    #allocation3 [shape = 's32[1]{0}', space=sflag, size = 0x4, scoped, tag = 'scoped memory for tpu_custom_call.1']
    #allocation4 [shape = 's32[1]{0}', space=sflag, size = 0x4, scoped, tag = 'scoped memory for tpu_custom_call.1']
    #allocation5 [shape = 'u8[8192]{0}', space=vmem, size = 0x2000, scoped, tag = 'input window, operand 1, single buffered']
    #allocation6 [shape = 's32[1]{0}', space=sflag, size = 0x4, scoped, tag = 'scoped memory for tpu_custom_call.1']
    #allocation7 [shape = 'u8[4096]{0}', space=vmem, size = 0x1000, scoped, tag = 'output window, operand 0, single buffered']
    %8 = vsyncpa [#allocation3], 0
    %9 = vsyncpa [#allocation6], 0
    %10 = vsyncpa [#allocation4], 0
    // Predicated region
    $region2: #{tpu_custom_call.1} parent=1 // pred_check
      _
    $region3: #{tpu_custom_call.1} parent=1 // pred_check_branch
      %12 = sbr.rel (0) target = $region5
    $region4: #{tpu_custom_call.1} parent=1 // pred_region
      %s14 = ssub.s32 128, 128
      %15 = vsyncadd [#allocation3], %s14
      %s17 = sshll.u32 [#allocation2], 4
      %s18 = int_to_ptr.vmem [resolvable:$true] %s17
      %20 = dma.hbm_to_vmem [thread:$0]  %s0, 128, %s18, [#allocation3]
    $region5: #{tpu_custom_call.1} parent=1 // pred_fallthru
      _
    // Predicated region
    $region6: #{tpu_custom_call.1} parent=1 // pred_check
      _
    $region7: #{tpu_custom_call.1} parent=1 // pred_check_branch
      %22 = sbr.rel (0) target = $region9
    $region8: #{tpu_custom_call.1} parent=1 // pred_region
      %s24 = ssub.s32 256, 256
      %25 = vsyncadd [#allocation6], %s24
      %s26 = sshll.u32 [#allocation5], 4
      %s27 = int_to_ptr.vmem [resolvable:$true] %s26
      %32 = dma.hbm_to_vmem [thread:$0]  %s1, 256, %s27, [#allocation6], 128, 128, 8
    $region9: #{tpu_custom_call.1} parent=1 // pred_fallthru
      _
    // Predicated region
    $region10: #{tpu_custom_call.1} parent=1 // pred_check
      _
    $region11: #{tpu_custom_call.1} parent=1 // pred_check_branch
      %34 = sbr.rel (0) target = $region13
    $region12: #{tpu_custom_call.1} parent=1 // pred_region
      _
    $region13: #{tpu_custom_call.1} parent=1 // pred_fallthru
      _
    // Predicated region
    $region14: #{tpu_custom_call.1} parent=1 // pred_check
      _
    $region15: #{tpu_custom_call.1} parent=1 // pred_check_branch
      %36 = sbr.rel (0) target = $region17
    $region16: #{tpu_custom_call.1} parent=1 // pred_region
      %37 = dma.done [#allocation3], 128
    $region17: #{tpu_custom_call.1} parent=1 // pred_fallthru
      _
    // Predicated region
    $region18: #{tpu_custom_call.1} parent=1 // pred_check
      _
    $region19: #{tpu_custom_call.1} parent=1 // pred_check_branch
      %39 = sbr.rel (0) target = $region21
    $region20: #{tpu_custom_call.1} parent=1 // pred_region
      %40 = dma.done [#allocation6], 256
    $region21: #{tpu_custom_call.1} parent=1 // pred_fallthru
      _
    %v41 = vld [vmem:[#allocation2] sm:$0xff]
    %v42 = vld [vmem:[#allocation5] sm:$0xff]
    %v43 = vld [vmem:[#allocation5 + $0x8] sm:$0xff]
    %v44 = vld [vmem:[%s2] sm:$0x1]
    %v46 = vlaneseq
    %v47 = vshrl.u32 %v46, 7
    %v48 = vsub.s32 0, %v47
    %v49 = vrot.slane %v44, %v48
    %vm51 = vcmask 130048
    %v53 = vsel %vm51, %v41, 0
    %55 = vmatprep.subr.mxu0 0.0
    %56 = vmatpush1.msra.mxu0 %v42
    %57 = vmatprep.subr.mxu0 0.0
    %58 = vmatpush1.msra.mxu0 %v43
    %59 = vmatprep.subr.mxu0 0.0
    %60 = vmatpush1.msra.mxu0 0.0
    %61 = vmatprep.subr.mxu0 0.0
    %62 = vmatpush1.msra.mxu0 0.0
    %63 = vmatprep.subr.mxu0 0.0
    %64 = vmatpush1.msra.mxu0 0.0
    %65 = vmatprep.subr.mxu0 0.0
    %66 = vmatpush1.msra.mxu0 0.0
    %67 = vmatprep.subr.mxu0 0.0
    %68 = vmatpush1.msra.mxu0 0.0
    %69 = vmatprep.subr.mxu0 0.0
    %70 = vmatpush1.msra.mxu0 0.0
    %71 = vmatprep.subr.mxu0 0.0
    %72 = vmatpush1.msra.mxu0 0.0
    %73 = vmatprep.subr.mxu0 0.0
    %74 = vmatpush1.msra.mxu0 0.0
    %75 = vmatprep.subr.mxu0 0.0
    %76 = vmatpush1.msra.mxu0 0.0
    %77 = vmatprep.subr.mxu0 0.0
    %78 = vmatpush1.msra.mxu0 0.0
    %79 = vmatprep.subr.mxu0 0.0
    %80 = vmatpush1.msra.mxu0 0.0
    %81 = vmatprep.subr.mxu0 0.0
    %82 = vmatpush1.msra.mxu0 0.0
    %83 = vmatprep.subr.mxu0 0.0
    %84 = vmatpush1.msra.mxu0 0.0
    %85 = vmatprep.subr.mxu0 0.0
    %86 = vmatpush1.msra.mxu0 0.0
    %87 = vmatprep.subr.mxu0 0.0
    %88 = vmatpush1.msra.mxu0 0.0
    %89 = vmatprep.subr.mxu0 0.0
    %90 = vmatpush1.msra.mxu0 0.0
    %91 = vmatprep.subr.mxu0 0.0
    %92 = vmatpush1.msra.mxu0 0.0
    %93 = vmatprep.subr.mxu0 0.0
    %94 = vmatpush1.msra.mxu0 0.0
    %95 = vmatprep.subr.mxu0 0.0
    %96 = vmatpush1.msra.mxu0 0.0
    %97 = vmatprep.subr.mxu0 0.0
    %98 = vmatpush1.msra.mxu0 0.0
    %99 = vmatprep.subr.mxu0 0.0
    %100 = vmatpush1.msra.mxu0 0.0
    %101 = vmatprep.subr.mxu0 0.0
    %102 = vmatpush1.msra.mxu0 0.0
    %103 = vmatprep.subr.mxu0 0.0
    %104 = vmatpush1.msra.mxu0 0.0
    %105 = vmatprep.subr.mxu0 0.0
    %106 = vmatpush1.msra.mxu0 0.0
    %107 = vmatprep.subr.mxu0 0.0
    %108 = vmatpush1.msra.mxu0 0.0
    %109 = vmatprep.subr.mxu0 0.0
    %110 = vmatpush1.msra.mxu0 0.0
    %111 = vmatprep.subr.mxu0 0.0
    %112 = vmatpush1.msra.mxu0 0.0
    %113 = vmatprep.subr.mxu0 0.0
    %114 = vmatpush1.msra.mxu0 0.0
    %115 = vmatprep.subr.mxu0 0.0
    %116 = vmatpush1.msra.mxu0 0.0
    %117 = vmatprep.subr.mxu0 0.0
    %118 = vmatpush1.msra.mxu0 0.0
    %119 = vmatprep.mubr.f32.mxu0 0.0
    %120 = vmatmul.mubr.f32.gmra.mrb[0].mxu0 %v53
    %v121 = vpop.f32.mrb[0].mxu0
    %v122 = vadd.f32 %v49, %v121
    %v123 = vpop.f32.mrb[0].mxu0
    %124 = vdwg.mxu0
    %v125 = vmax.f32 %v122, 0.0
    %vm126 = vcmask 261120
    %127 = vst.msk [vmem:[#allocation7] sm:$0xff] %vm126, %v125
    // Predicated region
    $region22: #{tpu_custom_call.1} parent=1 // pred_check
      _
    $region23: #{tpu_custom_call.1} parent=1 // pred_check_branch
      %129 = sbr.rel (0) target = $region25
    $region24: #{tpu_custom_call.1} parent=1 // pred_region
      %s131 = ssub.s32 128, 128
      %132 = vsyncadd [#allocation4], %s131
      %s134 = sshll.u32 [#allocation7], 4
      %s135 = int_to_ptr.vmem [resolvable:$true] %s134
      %137 = dma.vmem_to_hbm [thread:$0]  %s135, 128, %s3, [#allocation4]
    $region25: #{tpu_custom_call.1} parent=1 // pred_fallthru
      _
    // Predicated region
    $region26: #{tpu_custom_call.1} parent=1 // pred_check
      _
    $region27: #{tpu_custom_call.1} parent=1 // pred_check_branch
      %139 = sbr.rel (0) target = $region29
    $region28: #{tpu_custom_call.1} parent=1 // pred_region
      %140 = dma.done [#allocation4], 128
    $region29: #{tpu_custom_call.1} parent=1 // pred_fallthru
      _
    %141 = vsyncpa [#allocation3], 1
    %142 = vsyncpa [#allocation6], 1
    %143 = vsyncpa [#allocation4], 1

</llo_original>
